<compile_context>
chip_gen: v7x
topology: tpu7x:2x2x1
jax: 0.10.0
libtpu: 0.0.40
codegen_flags: <defaults>
</compile_context>

<pallas_src>
import functools

import jax
import jax.numpy as jnp
from jax.experimental import pallas as pl
from jax.experimental.pallas import tpu as pltpu


def _multiclass_kernel(first_ref, last_ref, w_ref, b_ref, o_ref, acc_ref, *,
                       scale):
    # first_ref / last_ref: [TB, TS, H]   w_ref: [H, C]   b_ref: [1, C]
    # o_ref: [TB, C]                      acc_ref: [TB, H] f32 scratch
    s_idx = pl.program_id(1)

    @pl.when(s_idx == 0)
    def _():
        acc_ref[...] = jnp.zeros_like(acc_ref)

    # Single fused pass: sum (first + last) over the sequence tile.
    x = first_ref[...].astype(jnp.float32) + last_ref[...].astype(jnp.float32)
    acc_ref[...] += jnp.sum(x, axis=1)                      # [TB, H]

    @pl.when(s_idx == pl.num_programs(1) - 1)
    def _():
        # 'first-last-avg' pooling: 0.5 * (mean_seq(first) + mean_seq(last))
        # == (sum over seq of (first+last)) * (0.5 / S).
        pooled = acc_ref[...] * scale                       # [TB, H]
        logits = jnp.dot(pooled, w_ref[...].astype(jnp.float32),
                         preferred_element_type=jnp.float32)
        logits = logits + b_ref[...].astype(jnp.float32)    # [TB, C]
        o_ref[...] = logits.astype(o_ref.dtype)


def _pick_tile(dim, target):
    """Largest divisor of `dim` that is <= target and a multiple of 8
    (or the full dim itself), so blocks satisfy TPU (8,128) layout rules."""
    if dim <= target:
        return dim
    for t in range(target, 0, -1):
        if dim % t == 0 and t % 8 == 0:
            return t
    return dim


def multiclass_forward(first_hidden, last_hidden, fc_weight, fc_bias,
                       *, tb=None, ts=None):
    """first_hidden / last_hidden: [B, S, H] (f32 or bf16);
    fc_weight: [C, H] (PyTorch layout); fc_bias: [C]. Returns logits [B, C] f32."""
    B, S, H = first_hidden.shape
    C = fc_bias.shape[0]

    # Tile sizes: batch tile must be a multiple of 8 (output block constraint)
    # or the full batch; sequence tile likewise. Sized so 2 tensors x 2 DMA
    # buffers x TB*TS*H*4B stays comfortably inside the default scoped VMEM
    # budget on all generations (incl. v7x's 64 MiB total VMEM).
    if tb is None:
        tb = _pick_tile(B, 16)
    if ts is None:
        ts = _pick_tile(S, 256)
    assert B % tb == 0 and S % ts == 0

    w_t = fc_weight.T                   # [H, C]
    b2d = fc_bias.reshape(1, C)         # [1, C]

    kernel = functools.partial(_multiclass_kernel, scale=0.5 / S)

    return pl.pallas_call(
        kernel,
        out_shape=jax.ShapeDtypeStruct((B, C), jnp.float32),
        grid_spec=pltpu.PrefetchScalarGridSpec(
            num_scalar_prefetch=0,
            grid=(B // tb, S // ts),
            in_specs=[
                pl.BlockSpec((tb, ts, H), lambda b, s: (b, s, 0)),
                pl.BlockSpec((tb, ts, H), lambda b, s: (b, s, 0)),
                # Constant block index -> weight/bias stay resident in VMEM.
                pl.BlockSpec((H, C), lambda b, s: (0, 0)),
                pl.BlockSpec((1, C), lambda b, s: (0, 0)),
            ],
            out_specs=pl.BlockSpec((tb, C), lambda b, s: (b, 0)),
            scratch_shapes=[pltpu.VMEM((tb, H), jnp.float32)],
        ),
        compiler_params=pltpu.CompilerParams(
            dimension_semantics=("parallel", "arbitrary")),
    )(first_hidden, last_hidden, w_t, b2d)


if __name__ == "__main__":
    # TODO(synk): the frozen BERT encoder itself is not translated; its
    # hidden_states[1] and hidden_states[-1] outputs are synthesized here.
    B, S, H, C = 2, 16, 32, 10

    key = jax.random.PRNGKey(0)
    k1, k2, k3, k4 = jax.random.split(key, 4)

    first_hidden = jax.random.normal(k1, (B, S, H), dtype=jnp.float32)
    last_hidden = jax.random.normal(k2, (B, S, H), dtype=jnp.float32)

    # Deterministic fc params (nn.Linear(hidden_size=H, num_classes=C)).
    bound = 1.0 / jnp.sqrt(H)
    fc_weight = jax.random.uniform(k3, (C, H), minval=-bound, maxval=bound,
                                   dtype=jnp.float32)
    fc_bias = jax.random.uniform(k4, (C,), minval=-bound, maxval=bound,
                                 dtype=jnp.float32)

    # Force a 2-step sequence-reduction grid (ts=8 < S=16) so the tiled
    # accumulator path is exercised even at toy shapes.
    out = multiclass_forward(first_hidden, last_hidden, fc_weight, fc_bias,
                             tb=B, ts=8)
    out = jax.block_until_ready(out)

    # Reference check in plain JAX.
    pooled_ref = 0.5 * (first_hidden.mean(axis=1) + last_hidden.mean(axis=1))
    ref = pooled_ref @ fc_weight.T + fc_bias
    assert out.shape == (B, C)
    assert jnp.allclose(out, ref, atol=1e-5, rtol=1e-5)

    print("KERNEL_OK")
</pallas_src>

<mosaic_0001>
module attributes {stable_mosaic.version = 11 : i64} {
  func.func @_multiclass_kernel(%arg0: i32, %arg1: i32, %arg2: memref<2x8x32xf32, #tpu.memory_space<vmem>>, %arg3: memref<2x8x32xf32, #tpu.memory_space<vmem>>, %arg4: memref<32x10xf32, #tpu.memory_space<vmem>>, %arg5: memref<1x10xf32, #tpu.memory_space<vmem>>, %arg6: memref<2x10xf32, #tpu.memory_space<vmem>>, %arg7: memref<2x32xf32, #tpu.memory_space<vmem>>) attributes {dimension_semantics = [#tpu.dimension_semantics<parallel>, #tpu.dimension_semantics<arbitrary>], iteration_bounds = array<i64: 1, 2>, scalar_prefetch = 0 : i64, scratch_operands = 1 : i64, tpu.core_type = #tpu.core_type<tc>, window_params = [{transform_indices = @transform_0, window_bounds = array<i64: 2, 8, 32>}, {transform_indices = @transform_1, window_bounds = array<i64: 2, 8, 32>}, {pipeline_mode = #tpu.pipeline_mode<synchronous>, transform_indices = @transform_2, window_bounds = array<i64: 32, 10>}, {pipeline_mode = #tpu.pipeline_mode<synchronous>, transform_indices = @transform_3, window_bounds = array<i64: 1, 10>}, {transform_indices = @transform_4, window_bounds = array<i64: 2, 10>}]} {
    %c0_i32 = arith.constant 0 : i32
    %0 = arith.cmpi eq, %arg1, %c0_i32 : i32
    %1 = arith.extui %0 : i1 to i32
    %c0_i32_0 = arith.constant 0 : i32
    %2 = arith.cmpi ne, %1, %c0_i32_0 : i32
    scf.if %2 {
      %cst_11 = arith.constant 0.000000e+00 : f32
      %13 = vector.broadcast %cst_11 : f32 to vector<2x32xf32>
      %c0_12 = arith.constant 0 : index
      %c0_13 = arith.constant 0 : index
      %14 = vector.load %arg7[%c0_12, %c0_13] : memref<2x32xf32, #tpu.memory_space<vmem>>, vector<2x32xf32>
      tpu.vector_store %arg7[%c0_12, %c0_13], %13 {strides = array<i32>} : memref<2x32xf32, #tpu.memory_space<vmem>>, vector<2x32xf32>,
    } else {
    }
    %c0 = arith.constant 0 : index
    %c0_1 = arith.constant 0 : index
    %c0_2 = arith.constant 0 : index
    %3 = vector.load %arg2[%c0, %c0_1, %c0_2] : memref<2x8x32xf32, #tpu.memory_space<vmem>>, vector<2x8x32xf32>
    %c0_3 = arith.constant 0 : index
    %c0_4 = arith.constant 0 : index
    %c0_5 = arith.constant 0 : index
    %4 = vector.load %arg3[%c0_3, %c0_4, %c0_5] : memref<2x8x32xf32, #tpu.memory_space<vmem>>, vector<2x8x32xf32>
    %5 = arith.addf %3, %4 : vector<2x8x32xf32>
    %c0_6 = arith.constant 0 : index
    %c0_7 = arith.constant 0 : index
    %6 = vector.load %arg7[%c0_6, %c0_7] : memref<2x32xf32, #tpu.memory_space<vmem>>, vector<2x32xf32>
    %cst = arith.constant dense<0.000000e+00> : vector<2x32xf32>
    %7 = vector.multi_reduction <add>, %5, %cst [1] : vector<2x8x32xf32> to vector<2x32xf32>
    %8 = arith.addf %6, %7 : vector<2x32xf32>
    %c0_8 = arith.constant 0 : index
    %c0_9 = arith.constant 0 : index
    %9 = vector.load %arg7[%c0_8, %c0_9] : memref<2x32xf32, #tpu.memory_space<vmem>>, vector<2x32xf32>
    tpu.vector_store %arg7[%c0_8, %c0_9], %8 {strides = array<i32>} : memref<2x32xf32, #tpu.memory_space<vmem>>, vector<2x32xf32>,
    %c1_i32 = arith.constant 1 : i32
    %10 = arith.cmpi eq, %arg1, %c1_i32 : i32
    %11 = arith.extui %10 : i1 to i32
    %c0_i32_10 = arith.constant 0 : i32
    %12 = arith.cmpi ne, %11, %c0_i32_10 : i32
    scf.if %12 {
      %c0_11 = arith.constant 0 : index
      %c0_12 = arith.constant 0 : index
      %13 = vector.load %arg7[%c0_11, %c0_12] : memref<2x32xf32, #tpu.memory_space<vmem>>, vector<2x32xf32>
      %cst_13 = arith.constant 3.125000e-02 : f32
      %14 = vector.broadcast %cst_13 : f32 to vector<2x32xf32>
      %15 = arith.mulf %13, %14 : vector<2x32xf32>
      %c0_14 = arith.constant 0 : index
      %c0_15 = arith.constant 0 : index
      %16 = vector.load %arg4[%c0_14, %c0_15] : memref<32x10xf32, #tpu.memory_space<vmem>>, vector<32x10xf32>
      %cst_16 = arith.constant dense<0.000000e+00> : vector<2x10xf32>
      %17 = tpu.matmul %15, %16, %cst_16 {dimension_numbers = #tpu.dot_dimension_numbers<[1], [0], [0], [1], [0, 0, 1, 1], [], []>} : vector<2x32xf32>, vector<32x10xf32>, vector<2x10xf32> -> vector<2x10xf32>
      %c0_17 = arith.constant 0 : index
      %c0_18 = arith.constant 0 : index
      %18 = vector.load %arg5[%c0_17, %c0_18] : memref<1x10xf32, #tpu.memory_space<vmem>>, vector<1x10xf32>
      %19 = vector.broadcast %18 : vector<1x10xf32> to vector<2x10xf32>
      %20 = arith.addf %17, %19 : vector<2x10xf32>
      %c0_19 = arith.constant 0 : index
      %c0_20 = arith.constant 0 : index
      %21 = vector.load %arg6[%c0_19, %c0_20] : memref<2x10xf32, #tpu.memory_space<vmem>>, vector<2x10xf32>
      tpu.vector_store %arg6[%c0_19, %c0_20], %20 {strides = array<i32>} : memref<2x10xf32, #tpu.memory_space<vmem>>, vector<2x10xf32>,
    } else {
    }
    return
  }
  func.func @transform_0(%arg0: i32, %arg1: i32) -> (i32, i32, i32) {
    %c0_i32 = arith.constant 0 : i32
    %c0_i32_0 = arith.constant 0 : i32
    return %arg0, %arg1, %c0_i32 : i32, i32, i32
  }
  func.func @transform_1(%arg0: i32, %arg1: i32) -> (i32, i32, i32) {
    %c0_i32 = arith.constant 0 : i32
    %c0_i32_0 = arith.constant 0 : i32
    return %arg0, %arg1, %c0_i32 : i32, i32, i32
  }
  func.func @transform_2(%arg0: i32, %arg1: i32) -> (i32, i32) {
    %c0_i32 = arith.constant 0 : i32
    %c0_i32_0 = arith.constant 0 : i32
    %c0_i32_1 = arith.constant 0 : i32
    return %c0_i32, %c0_i32_0 : i32, i32
  }
  func.func @transform_3(%arg0: i32, %arg1: i32) -> (i32, i32) {
    %c0_i32 = arith.constant 0 : i32
    %c0_i32_0 = arith.constant 0 : i32
    %c0_i32_1 = arith.constant 0 : i32
    return %c0_i32, %c0_i32_0 : i32, i32
  }
  func.func @transform_4(%arg0: i32, %arg1: i32) -> (i32, i32) {
    %c0_i32 = arith.constant 0 : i32
    %c0_i32_0 = arith.constant 0 : i32
    return %arg0, %c0_i32 : i32, i32
  }
}

</mosaic_0001>

<llo_original>
// kernel: tpu_custom_call.1
$region0: #{tpu_custom_call.1}
  #allocation0 [shape = 'u32[]', space=smem, size = 0x4, offset = 0x4, fixed_abs, tag = 'smem constant byte address 0x4 - core index']
  #allocation1 [shape = 'u32[144,128]{1,0:T(1,128)}', space=vmem, size = 0x12000, scoped, tag = 'internal scratch']
  #allocation2 [shape = 'f32[2,32]{1,0:T(2,128)}', space=vmem, size = 0x400, scoped, tag = 'scratch operand']
  %s0 = inlined_call_operand.vmem [shape: f32[2,16,32], index: 0, kind: input, shape index: {}]
  %s1 = inlined_call_operand.hbm [shape: f32[2,16,32], index: 1, kind: input, shape index: {}]
  %s2 = inlined_call_operand.vmem [shape: f32[32,10], index: 2, kind: input, shape index: {}]
  %s3 = inlined_call_operand.vmem [shape: f32[1,10], index: 3, kind: input, shape index: {}]
  %s4 = inlined_call_operand.hbm [shape: f32[2,10], index: 4, kind: output, shape index: {}]
  %s5 = sld [smem:[#allocation0]]
  $region99: #{tpu_custom_call.1} parent=0
    _
  %s7 = ssub.s32 1, %s5
  %s8 = scalar_select 0, %s7, %s5
  $region1: #{tpu_custom_call.1} parent=0
    #allocation3 [shape = 'u8[16384]{0}', space=vmem, size = 0x4000, scoped, tag = 'input window, operand 0']
    #allocation4 [shape = 'u8[16384]{0}', space=vmem, size = 0x4000, scoped, tag = 'input window, operand 1']
    #allocation5 [shape = 's32[2]{0}', space=sflag, size = 0x8, scoped, tag = 'scoped memory for tpu_custom_call.1']
    #allocation6 [shape = 's32[2]{0}', space=sflag, size = 0x8, scoped, tag = 'scoped memory for tpu_custom_call.1']
    #allocation7 [shape = 'u8[1024]{0}', space=vmem, size = 0x400, scoped, tag = 'output window, operand 0, single buffered']
    %9 = vsyncpa [#allocation5], 0
    %s10 = scalar_lea.sflag [#allocation5], 1
    %11 = vsyncpa %s10, 0
    %12 = vsyncpa [#allocation6], 0
    loop: start=0, step=1, limit=4
    $region2: #{tpu_custom_call.1} parent=1 // loop_pre_header
      _
    $region3: #{tpu_custom_call.1} parent=1 // loop_header
      %s14 = sphi 0, %s18
      %p15 = scmp.ge.s32.totalorder %s14, 4
      %s21 = sphi 0, %s33
      %s22 = sphi 0, %s29
      %s23 = sphi 0, %s21
      %s24 = sphi 0, %s22
      %s25 = sphi 0, %s23
      %s26 = sphi 0, %s24
      %s38 = sphi 0, %s40
      %s41 = sphi 0, %s38
      %s42 = sphi 0, %s41
      %s58 = sphi 0, %s42
      %s66 = sphi 0, %s68
      %s69 = sphi 0, %s66
      %s70 = sphi 0, %s69
      %s86 = sphi 0, %s70
      %s90 = sphi 0, %s90
      %s92 = sphi 0, %s90
      %s93 = sphi 0, %s92
      %s107 = sphi 0, %s93
      %s111 = sphi 0, %s111
      %s113 = sphi 0, %s111
      %s114 = sphi 0, %s113
      %s128 = sphi 0, %s114
      %s134 = sphi 0, %s136
      %s137 = sphi 0, %s134
      %s138 = sphi 0, %s137
      %s154 = sphi 0, %s138
    $region4: #{tpu_custom_call.1} parent=1 // loop_header_branch
      %17 = sbr.rel (%p15) target = $region8
    $region5: #{tpu_custom_call.1} parent=1 // loop_body
      %s19 = ssub.s32 %s14, 1
      %s20 = ssub.s32 %s14, 2
      %s27 = sadd.s32 1, %s22
      %p28 = scmp.ge.s32.totalorder %s27, 2
      %s29 = scalar_select %p28, 0, %s27
      %s30 = sadd.s32 1, %s21
      %s31 = scalar_select %p28, %s30, %s21
      %p32 = scmp.ge.s32.totalorder %s31, 1
      %s33 = scalar_select %p32, 0, %s31
      %s34 = ssub.s32 %s21, %s33
      %s35 = ssub.s32 %s22, %s29
      %s36 = sor.u32 %s34, %s35
      %p37 = scmp.eq.s32.totalorder %s36, 0
      %s39 = sadd.s32 %s38, 1
      %s40 = scalar_select %p37, %s38, %s39
      %p43 = pneg %p37
      %p44 = scmp.eq.s32.totalorder %s14, 1
      %p45 = por %p43, %p44
      %p46 = scmp.ne.s32.totalorder %s38, %s41
      %p47 = scmp.eq.s32.totalorder %s14, 0
      %p48 = por %p46, %p47
      %p49 = scmp.ne.s32.totalorder %s38, %s41
      %p50 = scmp.eq.s32.totalorder %s19, 1
      %p51 = por %p49, %p50
      %p52 = scmp.ne.s32.totalorder %s41, %s42
      %p53 = scmp.eq.s32.totalorder %s19, 0
      %p54 = por %p52, %p53
      %p55 = scmp.ne.s32.totalorder %s41, %s42
      %p56 = scmp.eq.s32.totalorder %s20, 1
      %p57 = por %p55, %p56
      %p59 = scmp.ne.s32.totalorder %s42, %s58
      %p60 = scmp.eq.s32.totalorder %s20, 0
      %p61 = por %p59, %p60
      %s62 = ssub.s32 %s21, %s33
      %s63 = ssub.s32 %s22, %s29
      %s64 = sor.u32 %s62, %s63
      %p65 = scmp.eq.s32.totalorder %s64, 0
      %s67 = sadd.s32 %s66, 1
      %s68 = scalar_select %p65, %s66, %s67
      %p71 = pneg %p65
      %p72 = scmp.eq.s32.totalorder %s14, 1
      %p73 = por %p71, %p72
      %p74 = scmp.ne.s32.totalorder %s66, %s69
      %p75 = scmp.eq.s32.totalorder %s14, 0
      %p76 = por %p74, %p75
      %p77 = scmp.ne.s32.totalorder %s66, %s69
      %p78 = scmp.eq.s32.totalorder %s19, 1
      %p79 = por %p77, %p78
      %p80 = scmp.ne.s32.totalorder %s69, %s70
      %p81 = scmp.eq.s32.totalorder %s19, 0
      %p82 = por %p80, %p81
      %p83 = scmp.ne.s32.totalorder %s69, %s70
      %p84 = scmp.eq.s32.totalorder %s20, 1
      %p85 = por %p83, %p84
      %p87 = scmp.ne.s32.totalorder %s70, %s86
      %p88 = scmp.eq.s32.totalorder %s20, 0
      %p89 = por %p87, %p88
      %s91 = sadd.s32 %s90, 1
      %p94 = scmp.eq.s32.totalorder %s14, 1
      %p95 = scmp.ne.s32.totalorder %s90, %s92
      %p96 = scmp.eq.s32.totalorder %s14, 0
      %p97 = por %p95, %p96
      %p98 = scmp.ne.s32.totalorder %s90, %s92
      %p99 = scmp.eq.s32.totalorder %s19, 1
      %p100 = por %p98, %p99
      %p101 = scmp.ne.s32.totalorder %s92, %s93
      %p102 = scmp.eq.s32.totalorder %s19, 0
      %p103 = por %p101, %p102
      %p104 = scmp.ne.s32.totalorder %s92, %s93
      %p105 = scmp.eq.s32.totalorder %s20, 1
      %p106 = por %p104, %p105
      %p108 = scmp.ne.s32.totalorder %s93, %s107
      %p109 = scmp.eq.s32.totalorder %s20, 0
      %p110 = por %p108, %p109
      %s112 = sadd.s32 %s111, 1
      %p115 = scmp.eq.s32.totalorder %s14, 1
      %p116 = scmp.ne.s32.totalorder %s111, %s113
      %p117 = scmp.eq.s32.totalorder %s14, 0
      %p118 = por %p116, %p117
      %p119 = scmp.ne.s32.totalorder %s111, %s113
      %p120 = scmp.eq.s32.totalorder %s19, 1
      %p121 = por %p119, %p120
      %p122 = scmp.ne.s32.totalorder %s113, %s114
      %p123 = scmp.eq.s32.totalorder %s19, 0
      %p124 = por %p122, %p123
      %p125 = scmp.ne.s32.totalorder %s113, %s114
      %p126 = scmp.eq.s32.totalorder %s20, 1
      %p127 = por %p125, %p126
      %p129 = scmp.ne.s32.totalorder %s114, %s128
      %p130 = scmp.eq.s32.totalorder %s20, 0
      %p131 = por %p129, %p130
      %s132 = ssub.s32 %s21, %s33
      %p133 = scmp.eq.s32.totalorder %s132, 0
      %s135 = sadd.s32 %s134, 1
      %s136 = scalar_select %p133, %s134, %s135
      %p139 = pneg %p133
      %p140 = scmp.eq.s32.totalorder %s14, 1
      %p141 = por %p139, %p140
      %p142 = scmp.ne.s32.totalorder %s134, %s137
      %p143 = scmp.eq.s32.totalorder %s14, 0
      %p144 = por %p142, %p143
      %p145 = scmp.ne.s32.totalorder %s134, %s137
      %p146 = scmp.eq.s32.totalorder %s19, 1
      %p147 = por %p145, %p146
      %p148 = scmp.ne.s32.totalorder %s137, %s138
      %p149 = scmp.eq.s32.totalorder %s19, 0
      %p150 = por %p148, %p149
      %p151 = scmp.ne.s32.totalorder %s137, %s138
      %p152 = scmp.eq.s32.totalorder %s20, 1
      %p153 = por %p151, %p152
      %p155 = scmp.ne.s32.totalorder %s138, %s154
      %p156 = scmp.eq.s32.totalorder %s20, 0
      %p157 = por %p155, %p156
      %p158 = scmp.le.s32.totalorder 1, %s14
      %p159 = scmp.lt.s32.totalorder %s14, 3
      %p160 = pnand %p158, %p159
      %p161 = pneg %p160
      // Predicated region
      $region9: #{tpu_custom_call.1} parent=5 // pred_check
        _
      $region10: #{tpu_custom_call.1} parent=5 // pred_check_branch
        %163 = sbr.rel (%p160) target = $region12
      $region11: #{tpu_custom_call.1} parent=5 // pred_region
        %s164 = ssub.s32 %s14, 1
        // Predicated region
        $region13: #{tpu_custom_call.1} parent=11 // pred_check
          %p165 = pneg %p103
        $region14: #{tpu_custom_call.1} parent=11 // pred_check_branch
          %167 = sbr.rel (%p165) target = $region16
        $region15: #{tpu_custom_call.1} parent=11 // pred_region
          _
        $region16: #{tpu_custom_call.1} parent=11 // pred_fallthru
          _
        // Predicated region
        $region17: #{tpu_custom_call.1} parent=11 // pred_check
          %p168 = pneg %p124
        $region18: #{tpu_custom_call.1} parent=11 // pred_check_branch
          %170 = sbr.rel (%p168) target = $region20
        $region19: #{tpu_custom_call.1} parent=11 // pred_region
          _
        $region20: #{tpu_custom_call.1} parent=11 // pred_fallthru
          _
      $region12: #{tpu_custom_call.1} parent=5 // pred_fallthru
        _
      %p171 = scmp.lt.s32.totalorder %s14, 2
      // Predicated region
      $region21: #{tpu_custom_call.1} parent=5 // pred_check
        %p172 = pneg %p171
      $region22: #{tpu_custom_call.1} parent=5 // pred_check_branch
        %174 = sbr.rel (%p172) target = $region24
      $region23: #{tpu_custom_call.1} parent=5 // pred_region
        // Predicated region
        $region25: #{tpu_custom_call.1} parent=23 // pred_check
          %p175 = pneg %p48
        $region26: #{tpu_custom_call.1} parent=23 // pred_check_branch
          %177 = sbr.rel (%p175) target = $region28
        $region27: #{tpu_custom_call.1} parent=23 // pred_region
          %s178 = sand.u32 %s38, 1
          %s179 = sand.u32 %s38, 1
          %s180 = smul.addr %s179, 16
          %s181 = scalar_lea.vmem [#allocation3], %s180
          %s182 = smul.u32 2, %s21
          %s183 = smul.addr %s182, 2
          %s184 = sadd.s32 %s22, %s183
          %s185 = smul.addr %s184, 8
          %s186 = scalar_lea.vmem %s0, %s185
          // Predicated region
          $region29: #{tpu_custom_call.1} parent=27 // pred_check
            _
          $region30: #{tpu_custom_call.1} parent=27 // pred_check_branch
            %188 = sbr.rel (0) target = $region32
          $region31: #{tpu_custom_call.1} parent=27 // pred_region
            // Predicated region
            $region33: #{tpu_custom_call.1} parent=31 // pred_check
              _
            $region34: #{tpu_custom_call.1} parent=31 // pred_check_branch
              %190 = sbr.rel (0) target = $region36
            $region35: #{tpu_custom_call.1} parent=31 // pred_region
              // Predicated region
              $region48: #{tpu_custom_call.1} parent=35 // pred_check
                _
              $region49: #{tpu_custom_call.1} parent=35 // pred_check_branch
                %207 = sbr.rel (0) target = $region51
              $region50: #{tpu_custom_call.1} parent=35 // pred_region
                loop: start=0, step=1, limit=1
                $region52: #{tpu_custom_call.1} parent=50 // loop_pre_header
                  _
                $region53: #{tpu_custom_call.1} parent=50 // loop_header
                  %s209 = sphi 0, %s213
                  %p210 = scmp.ge.s32.totalorder %s209, 1
                  %s214 = sphi %s186, %s186
                  %s215 = sphi %s181, %s181
                $region54: #{tpu_custom_call.1} parent=50 // loop_header_branch
                  %212 = sbr.rel (%p210) target = $region58
                $region55: #{tpu_custom_call.1} parent=50 // loop_body
                  %v216 = vld [vmem:[%s214] sm:$0xff]
                  %217 = vst [vmem:[%s215] sm:$0xff] %v216
                  %v218 = vld [vmem:[%s214 + $0x10] sm:$0xff]
                  %219 = vst [vmem:[%s215 + $0x8] sm:$0xff] %v218
                $region56: #{tpu_custom_call.1} parent=50 // loop_footer
                  %s213 = sadd.s32 1, %s209
                $region57: #{tpu_custom_call.1} parent=50 // loop_footer_branch
                  %208 = sbr.rel target = $region53
                $region58: #{tpu_custom_call.1} parent=50 // loop_exit
                  _
              $region51: #{tpu_custom_call.1} parent=35 // pred_fallthru
                _
              // Predicated region
              $region59: #{tpu_custom_call.1} parent=35 // pred_check
                _
              $region60: #{tpu_custom_call.1} parent=35 // pred_check_branch
                %221 = sbr.rel target = $region62
              $region61: #{tpu_custom_call.1} parent=35 // pred_region
                _
              $region62: #{tpu_custom_call.1} parent=35 // pred_fallthru
                _
            $region36: #{tpu_custom_call.1} parent=31 // pred_fallthru
              _
            // Predicated region
            $region37: #{tpu_custom_call.1} parent=31 // pred_check
              _
            $region38: #{tpu_custom_call.1} parent=31 // pred_check_branch
              %192 = sbr.rel target = $region40
            $region39: #{tpu_custom_call.1} parent=31 // pred_region
              loop: start=0, step=1, limit=1
              $region41: #{tpu_custom_call.1} parent=39 // loop_pre_header
                _
              $region42: #{tpu_custom_call.1} parent=39 // loop_header
                %s195 = sphi 0, %s199
                %p196 = scmp.ge.s32.totalorder %s195, 1
                %s200 = sphi %s186, %s186
                %s201 = sphi %s181, %s181
              $region43: #{tpu_custom_call.1} parent=39 // loop_header_branch
                %198 = sbr.rel (%p196) target = $region47
              $region44: #{tpu_custom_call.1} parent=39 // loop_body
                %v202 = vld [vmem:[%s200] sm:$0xff]
                %203 = vst [vmem:[%s201] sm:$0xff] %v202
                %v204 = vld [vmem:[%s200 + $0x10] sm:$0xff]
                %205 = vst [vmem:[%s201 + $0x8] sm:$0xff] %v204
              $region45: #{tpu_custom_call.1} parent=39 // loop_footer
                %s199 = sadd.s32 1, %s195
              $region46: #{tpu_custom_call.1} parent=39 // loop_footer_branch
                %194 = sbr.rel target = $region42
              $region47: #{tpu_custom_call.1} parent=39 // loop_exit
                _
            $region40: #{tpu_custom_call.1} parent=31 // pred_fallthru
              _
          $region32: #{tpu_custom_call.1} parent=27 // pred_fallthru
            _
          %222 = vnop
        $region28: #{tpu_custom_call.1} parent=23 // pred_fallthru
          _
        // Predicated region
        $region63: #{tpu_custom_call.1} parent=23 // pred_check
          %p223 = pneg %p76
        $region64: #{tpu_custom_call.1} parent=23 // pred_check_branch
          %225 = sbr.rel (%p223) target = $region66
        $region65: #{tpu_custom_call.1} parent=23 // pred_region
          %s226 = sand.u32 %s66, 1
          %s227 = scalar_lea.sflag [#allocation5], %s226
          %s228 = sand.u32 %s66, 1
          %s229 = smul.addr %s228, 16
          %s230 = scalar_lea.vmem [#allocation4], %s229
          %s231 = smul.u32 2, %s21
          %s233 = ssub.s32 256, 256
          %234 = vsyncadd %s227, %s233
          %s235 = smul.addr %s231, 2
          %s236 = sadd.s32 %s22, %s235
          %s237 = smul.addr %s236, 128
          %s238 = scalar_lea.hbm %s1, %s237
          %s239 = sshll.u32 %s230, 4
          %s240 = int_to_ptr.vmem [resolvable:$true] %s239
          %245 = dma.hbm_to_vmem [thread:$0]  %s238, 256, %s240, %s227, 256, 128, 8
        $region66: #{tpu_custom_call.1} parent=23 // pred_fallthru
          _
      $region24: #{tpu_custom_call.1} parent=5 // pred_fallthru
        _
      %p246 = scmp.le.s32.totalorder 1, %s14
      %p247 = scmp.lt.s32.totalorder %s14, 3
      %p248 = pnand %p246, %p247
      %p249 = pneg %p248
      // Predicated region
      $region67: #{tpu_custom_call.1} parent=5 // pred_check
        _
      $region68: #{tpu_custom_call.1} parent=5 // pred_check_branch
        %251 = sbr.rel (%p248) target = $region70
      $region69: #{tpu_custom_call.1} parent=5 // pred_region
        %s252 = ssub.s32 %s14, 1
        %s253 = sand.u32 %s41, 1
        %s254 = sand.u32 %s41, 1
        %s255 = smul.addr %s254, 16
        %s256 = scalar_lea.vmem [#allocation3], %s255
        // Predicated region
        $region71: #{tpu_custom_call.1} parent=69 // pred_check
          %p257 = pneg %p54
        $region72: #{tpu_custom_call.1} parent=69 // pred_check_branch
          %259 = sbr.rel (%p257) target = $region74
        $region73: #{tpu_custom_call.1} parent=69 // pred_region
          _
        $region74: #{tpu_custom_call.1} parent=69 // pred_fallthru
          _
        %s260 = sand.u32 %s69, 1
        %s261 = scalar_lea.sflag [#allocation5], %s260
        %s262 = sand.u32 %s69, 1
        %s263 = smul.addr %s262, 16
        %s264 = scalar_lea.vmem [#allocation4], %s263
        // Predicated region
        $region75: #{tpu_custom_call.1} parent=69 // pred_check
          %p265 = pneg %p82
        $region76: #{tpu_custom_call.1} parent=69 // pred_check_branch
          %267 = sbr.rel (%p265) target = $region78
        $region77: #{tpu_custom_call.1} parent=69 // pred_region
          %268 = dma.done %s261, 256
        $region78: #{tpu_custom_call.1} parent=69 // pred_fallthru
          _
        %s269 = sand.u32 %s41, 1
        %s270 = sand.u32 %s41, 1
        %s271 = smul.addr %s270, 16
        %s272 = scalar_lea.vmem [#allocation3], %s271
        %p273 = pneg %p54
        %p274 = pneg %p51
        %s275 = sand.u32 %s69, 1
        %s276 = scalar_lea.sflag [#allocation5], %s275
        %s277 = sand.u32 %s69, 1
        %s278 = smul.addr %s277, 16
        %s279 = scalar_lea.vmem [#allocation4], %s278
        %p280 = pneg %p82
        %p281 = pneg %p79
        %p282 = pneg %p103
        %p283 = pneg %p100
        %p284 = pneg %p124
        %p285 = pneg %p121
        %p286 = pneg %p150
        %p287 = pneg %p147
        %s288 = smul.u32 2, %s23
        %s289 = smul.u32 2, %s23
        %p290 = scmp.eq.s32.totalorder %s24, 0
        // Predicated region
        $region79: #{tpu_custom_call.1} parent=69 // pred_check
          %p291 = pneg %p290
        $region80: #{tpu_custom_call.1} parent=69 // pred_check_branch
          %293 = sbr.rel (%p291) target = $region82
        $region81: #{tpu_custom_call.1} parent=69 // pred_region
          %vm294 = vcmask 254976
          %295 = vst.msk [vmem:[#allocation2] sm:$0x3] %vm294, 0.0
        $region82: #{tpu_custom_call.1} parent=69 // pred_fallthru
          _
        %v296 = vld [vmem:[%s256] sm:$0xff]
        %v297 = vld [vmem:[%s256 + $0x8] sm:$0xff]
        %v298 = vld [vmem:[%s264] sm:$0xff]
        %v299 = vld [vmem:[%s264 + $0x8] sm:$0xff]
        %v300 = vadd.f32 %v296, %v298
        %v301 = vadd.f32 %v297, %v299
        %v302 = vld [vmem:[#allocation2] sm:$0x3]
        %vm303 = vcmask 261120
        %v304 = vsel %vm303, %v300, 0.0
        %v305 = vrot.slane %v304, 4
        %v306 = vadd.f32 %v304, %v305
        %v307 = vrot.slane %v306, 2
        %v308 = vadd.f32 %v306, %v307
        %v309 = vrot.slane %v308, 1
        %v310 = vadd.f32 %v308, %v309
        %v311 = vsel %vm303, %v301, 0.0
        %v312 = vrot.slane %v311, 4
        %v313 = vadd.f32 %v311, %v312
        %v314 = vrot.slane %v313, 2
        %v315 = vadd.f32 %v313, %v314
        %v316 = vrot.slane %v315, 1
        %v317 = vadd.f32 %v315, %v316
        %vm320 = vcmask 1041409
        %v321 = vsel %vm320, %v317, %v310
        %v323 = vadd.f32 %v302, %v321
        %vm324 = vcmask 254976
        %325 = vst.msk [vmem:[#allocation2] sm:$0x3] %vm324, %v323
        %p326 = scmp.eq.s32.totalorder %s24, 1
        // Predicated region
        $region83: #{tpu_custom_call.1} parent=69 // pred_check
          %p327 = pneg %p326
        $region84: #{tpu_custom_call.1} parent=69 // pred_check_branch
          %329 = sbr.rel (%p327) target = $region86
        $region85: #{tpu_custom_call.1} parent=69 // pred_region
          %v330 = vld [vmem:[#allocation2] sm:$0x3]
          %v331 = vmul.f32 %v330, 0.03125
          %v332 = vld [vmem:[%s2] sm:$0xff]
          %v333 = vld [vmem:[%s2 + $0x8] sm:$0xff]
          %v334 = vld [vmem:[%s2 + $0x10] sm:$0xff]
          %v335 = vld [vmem:[%s2 + $0x18] sm:$0xff]
          %v336 = vld [vmem:[%s3] sm:$0x1]
          %v338 = vlaneseq
          %v339 = vshrl.u32 %v338, 7
          %v340 = vsub.s32 0, %v339
          %v341 = vrot.slane %v336, %v340
          %v344 = vsel %vm303, %v331, 0
          %346 = vmatprep.subr.mxu0 0.0
          %347 = vmatpush1.msra.mxu0 %v332
          %348 = vmatprep.subr.mxu0 0.0
          %349 = vmatpush1.msra.mxu0 %v333
          %350 = vmatprep.subr.mxu0 0.0
          %351 = vmatpush1.msra.mxu0 %v334
          %352 = vmatprep.subr.mxu0 0.0
          %353 = vmatpush1.msra.mxu0 %v335
          %354 = vmatprep.subr.mxu0 0.0
          %355 = vmatpush1.msra.mxu0 0.0
          %356 = vmatprep.subr.mxu0 0.0
          %357 = vmatpush1.msra.mxu0 0.0
          %358 = vmatprep.subr.mxu0 0.0
          %359 = vmatpush1.msra.mxu0 0.0
          %360 = vmatprep.subr.mxu0 0.0
          %361 = vmatpush1.msra.mxu0 0.0
          %362 = vmatprep.subr.mxu0 0.0
          %363 = vmatpush1.msra.mxu0 0.0
          %364 = vmatprep.subr.mxu0 0.0
          %365 = vmatpush1.msra.mxu0 0.0
          %366 = vmatprep.subr.mxu0 0.0
          %367 = vmatpush1.msra.mxu0 0.0
          %368 = vmatprep.subr.mxu0 0.0
          %369 = vmatpush1.msra.mxu0 0.0
          %370 = vmatprep.subr.mxu0 0.0
          %371 = vmatpush1.msra.mxu0 0.0
          %372 = vmatprep.subr.mxu0 0.0
          %373 = vmatpush1.msra.mxu0 0.0
          %374 = vmatprep.subr.mxu0 0.0
          %375 = vmatpush1.msra.mxu0 0.0
          %376 = vmatprep.subr.mxu0 0.0
          %377 = vmatpush1.msra.mxu0 0.0
          %378 = vmatprep.subr.mxu0 0.0
          %379 = vmatpush1.msra.mxu0 0.0
          %380 = vmatprep.subr.mxu0 0.0
          %381 = vmatpush1.msra.mxu0 0.0
          %382 = vmatprep.subr.mxu0 0.0
          %383 = vmatpush1.msra.mxu0 0.0
          %384 = vmatprep.subr.mxu0 0.0
          %385 = vmatpush1.msra.mxu0 0.0
          %386 = vmatprep.subr.mxu0 0.0
          %387 = vmatpush1.msra.mxu0 0.0
          %388 = vmatprep.subr.mxu0 0.0
          %389 = vmatpush1.msra.mxu0 0.0
          %390 = vmatprep.subr.mxu0 0.0
          %391 = vmatpush1.msra.mxu0 0.0
          %392 = vmatprep.subr.mxu0 0.0
          %393 = vmatpush1.msra.mxu0 0.0
          %394 = vmatprep.subr.mxu0 0.0
          %395 = vmatpush1.msra.mxu0 0.0
          %396 = vmatprep.subr.mxu0 0.0
          %397 = vmatpush1.msra.mxu0 0.0
          %398 = vmatprep.subr.mxu0 0.0
          %399 = vmatpush1.msra.mxu0 0.0
          %400 = vmatprep.subr.mxu0 0.0
          %401 = vmatpush1.msra.mxu0 0.0
          %402 = vmatprep.subr.mxu0 0.0
          %403 = vmatpush1.msra.mxu0 0.0
          %404 = vmatprep.subr.mxu0 0.0
          %405 = vmatpush1.msra.mxu0 0.0
          %406 = vmatprep.subr.mxu0 0.0
          %407 = vmatpush1.msra.mxu0 0.0
          %408 = vmatprep.subr.mxu0 0.0
          %409 = vmatpush1.msra.mxu0 0.0
          %410 = vmatprep.mubr.f32.mxu0 0.0
          %411 = vmatmul.mubr.f32.gmra.mrb[0].mxu0 %v344
          %v412 = vpop.f32.mrb[0].mxu0
          %v413 = vadd.f32 %v341, %v412
          %v414 = vpop.f32.mrb[0].mxu0
          %415 = vdwg.mxu0
          %vm416 = vcmask 74752
          %417 = vst.msk [vmem:[#allocation7] sm:$0x3] %vm416, %v413
        $region86: #{tpu_custom_call.1} parent=69 // pred_fallthru
          _
        // Predicated region
        $region87: #{tpu_custom_call.1} parent=69 // pred_check
          %p418 = pneg %p147
        $region88: #{tpu_custom_call.1} parent=69 // pred_check_branch
          %420 = sbr.rel (%p418) target = $region90
        $region89: #{tpu_custom_call.1} parent=69 // pred_region
          %s422 = ssub.s32 32, 32
          %423 = vsyncadd [#allocation6], %s422
          %s424 = smul.addr %s23, 32
          %s425 = scalar_lea.hbm %s4, %s424
          %s427 = sshll.u32 [#allocation7], 4
          %s428 = int_to_ptr.vmem [resolvable:$true] %s427
          %430 = dma.vmem_to_hbm [thread:$0]  %s428, 32, %s425, [#allocation6]
        $region90: #{tpu_custom_call.1} parent=69 // pred_fallthru
          _
        // Predicated region
        $region91: #{tpu_custom_call.1} parent=69 // pred_check
          %p431 = pneg %p147
        $region92: #{tpu_custom_call.1} parent=69 // pred_check_branch
          %433 = sbr.rel (%p431) target = $region94
        $region93: #{tpu_custom_call.1} parent=69 // pred_region
          %434 = dma.done [#allocation6], 32
        $region94: #{tpu_custom_call.1} parent=69 // pred_fallthru
          _
      $region70: #{tpu_custom_call.1} parent=5 // pred_fallthru
        _
      %p435 = scmp.le.s32.totalorder 2, %s14
      // Predicated region
      $region95: #{tpu_custom_call.1} parent=5 // pred_check
        %p436 = pneg %p435
      $region96: #{tpu_custom_call.1} parent=5 // pred_check_branch
        %438 = sbr.rel (%p436) target = $region98
      $region97: #{tpu_custom_call.1} parent=5 // pred_region
        %s439 = ssub.s32 %s14, 2
      $region98: #{tpu_custom_call.1} parent=5 // pred_fallthru
        _
    $region6: #{tpu_custom_call.1} parent=1 // loop_footer
      %s18 = sadd.s32 1, %s14
    $region7: #{tpu_custom_call.1} parent=1 // loop_footer_branch
      %13 = sbr.rel target = $region3
    $region8: #{tpu_custom_call.1} parent=1 // loop_exit
      _
    %440 = vsyncpa [#allocation5], 1
    %s441 = scalar_lea.sflag [#allocation5], 1
    %442 = vsyncpa %s441, 1
    %443 = vsyncpa [#allocation6], 1
    %s444 = scalar_lea.sflag [#allocation6], 1
    %445 = vsyncpa %s444, 1

</llo_original>
